<compile_context>
chip_gen: v7x
topology: tpu7x:2x2x1
jax: 0.10.0
libtpu: 0.0.40
codegen_flags: <defaults>
</compile_context>

<pallas_src>
import functools

import jax
import jax.numpy as jnp
import numpy as np
from jax.experimental import pallas as pl
from jax.experimental.pallas import tpu as pltpu

_TARGET_BLOCK_ELEMS = 128 * 1024  # ~512 KiB of f32 per input block


def _choose_block_rows(rows, cols):
    """Row-block size: multiple of 8, <= rows, ~512 KiB of f32 per block."""
    br = max(8, (_TARGET_BLOCK_ELEMS // max(cols, 1)) // 8 * 8)
    max_br = (rows // 8) * 8  # largest multiple of 8 that fits
    return min(br, max_br)


def _l1_mse_kernel(pred_ref, gt_ref, l1_ref, mse_ref, abs_acc, sq_acc, *,
                   rows, block_rows, scale_clamp):
    """One pass over row-blocks; accumulates sum|d| and sum d^2 in VMEM scratch."""
    i = pl.program_id(0)

    @pl.when(i == 0)
    def _():
        abs_acc[...] = jnp.zeros_like(abs_acc)
        sq_acc[...] = jnp.zeros_like(sq_acc)

    p = pred_ref[...].astype(jnp.float32)
    g = gt_ref[...].astype(jnp.float32)
    if scale_clamp:
        # torch.clamp(pred * 255, 0, 255)  vs  gt * 255
        p = jnp.clip(p * 255.0, 0.0, 255.0)
        g = g * 255.0
    d = p - g

    if rows % block_rows != 0:
        # Last block extends past the array: mask out garbage rows before the
        # reduction (Pallas does not zero out-of-bounds VMEM).
        row_ids = i * block_rows + jax.lax.broadcasted_iota(
            jnp.int32, d.shape, dimension=0)
        d = jnp.where(row_ids < rows, d, 0.0)

    cols = d.shape[1]
    # (block_rows, W) -> (block_rows // 8, 8, W): groups of 8 sublanes, so the
    # axis-0 reduction is pure VPU vadds into the (8, W) scratch accumulators.
    d3 = d.reshape(block_rows // 8, 8, cols)
    abs_acc[...] += jnp.sum(jnp.abs(d3), axis=0)
    sq_acc[...] += jnp.sum(d3 * d3, axis=0)

    @pl.when(i == pl.num_programs(0) - 1)
    def _():
        # Single cross-lane/sublane reduce + (1,1) store, once per kernel.
        l1_ref[...] = jnp.sum(abs_acc[...], keepdims=True)
        mse_ref[...] = jnp.sum(sq_acc[...], keepdims=True)


def l1_and_mse(pred, gt, *, scale_clamp):
    """Returns (mean |p-g|, mean (p-g)^2) from a single Pallas reduction pass."""
    pred = jnp.asarray(pred)
    gt = jnp.asarray(gt)
    n = int(np.prod(pred.shape))
    cols = int(pred.shape[-1])
    rows = n // cols

    if rows < 8:
        # Degenerate tiny input: launch overhead dominates, use pure JAX.
        p = pred.astype(jnp.float32)
        g = gt.astype(jnp.float32)
        if scale_clamp:
            p = jnp.clip(p * 255.0, 0.0, 255.0)
            g = g * 255.0
        d = p - g
        return jnp.mean(jnp.abs(d)), jnp.mean(d * d)

    # Metadata-only reshape: (B, C, H, W) -> (B*C*H, W); dtype untouched
    # (kernel casts to f32 internally, so bf16 inputs halve HBM read traffic).
    pred2 = pred.reshape(rows, cols)
    gt2 = gt.reshape(rows, cols)

    block_rows = _choose_block_rows(rows, cols)
    grid = (pl.cdiv(rows, block_rows),)

    kernel = functools.partial(
        _l1_mse_kernel, rows=rows, block_rows=block_rows, scale_clamp=scale_clamp)

    sum_abs, sum_sq = pl.pallas_call(
        kernel,
        out_shape=(
            jax.ShapeDtypeStruct((1, 1), jnp.float32),
            jax.ShapeDtypeStruct((1, 1), jnp.float32),
        ),
        grid_spec=pltpu.PrefetchScalarGridSpec(
            num_scalar_prefetch=0,
            grid=grid,
            in_specs=[
                pl.BlockSpec((block_rows, cols), lambda i: (i, 0)),
                pl.BlockSpec((block_rows, cols), lambda i: (i, 0)),
            ],
            out_specs=(
                pl.BlockSpec((1, 1), lambda i: (0, 0)),
                pl.BlockSpec((1, 1), lambda i: (0, 0)),
            ),
            scratch_shapes=[
                pltpu.VMEM((8, cols), jnp.float32),
                pltpu.VMEM((8, cols), jnp.float32),
            ],
        ),
        compiler_params=pltpu.CompilerParams(
            dimension_semantics=("arbitrary",)  # reduction axis, output resident
        ),
    )(pred2, gt2)

    inv_n = jnp.float32(1.0 / n)
    return sum_abs[0, 0] * inv_n, sum_sq[0, 0] * inv_n


class TestLossVideo:
    """JAX/Pallas port of Test_Loss_Video (PSNR + L1, optional depth L1)."""

    def __init__(self, use_depth=True):
        self.use_depth = use_depth
        self.loss_dict = {}
        self.count = 0

    def _append(self, key, val):
        self.loss_dict.setdefault(key, []).append(val)

    def forward(self, inputs, outputs, mode="test"):
        pred_rgb = outputs["rgb"]
        gt_rgb = inputs["rgb"][:, 2]
        if pred_rgb.shape[0] != 1:
            raise ValueError("not implemented")
        action = inputs["action_name"][0]

        # One fused pass produces both the L1 and the MSE of the scaled images.
        l1_rgb, mse_rgb = l1_and_mse(pred_rgb, gt_rgb, scale_clamp=True)

        # kornia.losses.psnr_loss == -PSNR, PSNR = 10*log10(max_val^2 / mse)
        psnr_loss = -10.0 * jnp.log10(jnp.float32(255.0**2) / mse_rgb)
        self._append(f"{mode}/psnr_{action}", psnr_loss)
        self._append(f"{mode}/psnr_mean", psnr_loss)

        self._append(f"{mode}/l1_{action}", l1_rgb)
        self._append(f"{mode}/l1_mean", l1_rgb)

        if self.use_depth:
            pred_d = outputs["depth"]
            gt_d = inputs["depth"][:, 2]
            l1_d, _ = l1_and_mse(pred_d, gt_d, scale_clamp=False)
            self._append(f"{mode}/l1_depth_{action}", l1_d)
            self._append(f"{mode}/l1_depth_mean", l1_d)

        return jnp.float32(0.0), None

    def get_log(self):
        return {k: sum(v) / len(v) for k, v in self.loss_dict.items()}

    def reset_log(self):
        self.count = 0
        for k in self.loss_dict:
            self.loss_dict[k] = []


def _reference(pred_rgb, gt_rgb, pred_d, gt_d):
    """Pure-JAX reference for validation."""
    p = jnp.clip(pred_rgb.astype(jnp.float32) * 255.0, 0.0, 255.0)
    g = gt_rgb.astype(jnp.float32) * 255.0
    l1 = jnp.mean(jnp.abs(p - g))
    mse = jnp.mean((p - g) ** 2)
    psnr_loss = -10.0 * jnp.log10(255.0**2 / mse)
    l1_d = jnp.mean(jnp.abs(pred_d.astype(jnp.float32) - gt_d.astype(jnp.float32)))
    return l1, psnr_loss, l1_d


if __name__ == "__main__":
    key = jax.random.PRNGKey(0)
    k1, k2, k3, k4 = jax.random.split(key, 4)

    # B must be 1 (module raises otherwise).  H=20 makes the row count a
    # non-multiple of the chosen row block, exercising the multi-step grid and
    # the in-kernel partial-block masking path.
    B, T, C, H, W = 1, 3, 3, 20, 16

    inputs = {
        "rgb": jax.random.uniform(k1, (B, T, C, H, W), jnp.float32),
        "depth": jax.random.uniform(k2, (B, T, 1, H, W), jnp.float32),
        "action_name": ["wave"],
    }
    outputs = {
        "rgb": jax.random.uniform(k3, (B, C, H, W), jnp.float32),
        "depth": jax.random.uniform(k4, (B, 1, H, W), jnp.float32),
    }

    loss_mod = TestLossVideo(use_depth=True)
    loss_mod.forward(inputs, outputs, mode="test")
    log = loss_mod.get_log()
    jax.block_until_ready(list(log.values()))

    # sanity check against a pure-JAX reference
    ref_l1, ref_psnr, ref_l1_d = _reference(
        outputs["rgb"], inputs["rgb"][:, 2], outputs["depth"], inputs["depth"][:, 2]
    )
    np.testing.assert_allclose(
        np.asarray(log["test/l1_mean"]), np.asarray(ref_l1), rtol=1e-5, atol=1e-6
    )
    np.testing.assert_allclose(
        np.asarray(log["test/psnr_mean"]), np.asarray(ref_psnr), rtol=1e-5, atol=1e-6
    )
    np.testing.assert_allclose(
        np.asarray(log["test/l1_depth_mean"]), np.asarray(ref_l1_d), rtol=1e-5, atol=1e-6
    )

    print("KERNEL_OK")
</pallas_src>

<mosaic_0001>
module attributes {stable_mosaic.version = 11 : i64} {
  func.func @_l1_mse_kernel(%arg0: i32, %arg1: memref<56x16xf32, #tpu.memory_space<vmem>>, %arg2: memref<56x16xf32, #tpu.memory_space<vmem>>, %arg3: memref<1x1xf32, #tpu.memory_space<vmem>>, %arg4: memref<1x1xf32, #tpu.memory_space<vmem>>, %arg5: memref<8x16xf32, #tpu.memory_space<vmem>>, %arg6: memref<8x16xf32, #tpu.memory_space<vmem>>) attributes {dimension_semantics = [#tpu.dimension_semantics<arbitrary>], iteration_bounds = array<i64: 2>, scalar_prefetch = 0 : i64, scratch_operands = 2 : i64, tpu.core_type = #tpu.core_type<tc>, window_params = [{transform_indices = @transform_0, window_bounds = array<i64: 56, 16>}, {transform_indices = @transform_1, window_bounds = array<i64: 56, 16>}, {pipeline_mode = #tpu.pipeline_mode<synchronous>, transform_indices = @transform_2, window_bounds = array<i64: 1, 1>}, {pipeline_mode = #tpu.pipeline_mode<synchronous>, transform_indices = @transform_3, window_bounds = array<i64: 1, 1>}]} {
    %c0_i32 = arith.constant 0 : i32
    %0 = arith.cmpi eq, %arg0, %c0_i32 : i32
    %1 = arith.extui %0 : i1 to i32
    %c0_i32_0 = arith.constant 0 : i32
    %2 = arith.cmpi ne, %1, %c0_i32_0 : i32
    scf.if %2 {
      %cst_19 = arith.constant 0.000000e+00 : f32
      %36 = vector.broadcast %cst_19 : f32 to vector<8x16xf32>
      %c0_20 = arith.constant 0 : index
      %c0_21 = arith.constant 0 : index
      %37 = vector.load %arg5[%c0_20, %c0_21] : memref<8x16xf32, #tpu.memory_space<vmem>>, vector<8x16xf32>
      tpu.vector_store %arg5[%c0_20, %c0_21], %36 {strides = array<i32>} : memref<8x16xf32, #tpu.memory_space<vmem>>, vector<8x16xf32>,
      %cst_22 = arith.constant 0.000000e+00 : f32
      %38 = vector.broadcast %cst_22 : f32 to vector<8x16xf32>
      %c0_23 = arith.constant 0 : index
      %c0_24 = arith.constant 0 : index
      %39 = vector.load %arg6[%c0_23, %c0_24] : memref<8x16xf32, #tpu.memory_space<vmem>>, vector<8x16xf32>
      tpu.vector_store %arg6[%c0_23, %c0_24], %38 {strides = array<i32>} : memref<8x16xf32, #tpu.memory_space<vmem>>, vector<8x16xf32>,
    } else {
    }
    %c0 = arith.constant 0 : index
    %c0_1 = arith.constant 0 : index
    %3 = vector.load %arg1[%c0, %c0_1] : memref<56x16xf32, #tpu.memory_space<vmem>>, vector<56x16xf32>
    %c0_2 = arith.constant 0 : index
    %c0_3 = arith.constant 0 : index
    %4 = vector.load %arg2[%c0_2, %c0_3] : memref<56x16xf32, #tpu.memory_space<vmem>>, vector<56x16xf32>
    %cst = arith.constant 2.550000e+02 : f32
    %5 = vector.broadcast %cst : f32 to vector<56x16xf32>
    %6 = arith.mulf %3, %5 : vector<56x16xf32>
    %cst_4 = arith.constant 0.000000e+00 : f32
    %cst_5 = arith.constant 2.550000e+02 : f32
    %7 = vector.broadcast %cst_4 : f32 to vector<56x16xf32>
    %8 = arith.maximumf %7, %6 : vector<56x16xf32>
    %9 = vector.broadcast %cst_5 : f32 to vector<56x16xf32>
    %10 = arith.minimumf %9, %8 : vector<56x16xf32>
    %cst_6 = arith.constant 2.550000e+02 : f32
    %11 = vector.broadcast %cst_6 : f32 to vector<56x16xf32>
    %12 = arith.mulf %4, %11 : vector<56x16xf32>
    %13 = arith.subf %10, %12 : vector<56x16xf32>
    %c56_i32 = arith.constant 56 : i32
    %14 = arith.muli %arg0, %c56_i32 : i32
    %15 = tpu.iota {dimensions = array<i32: 0>} : vector<56x16xi32>
    %16 = vector.broadcast %14 : i32 to vector<56x16xi32>
    %17 = arith.addi %16, %15 : vector<56x16xi32>
    %c60_i32 = arith.constant 60 : i32
    %18 = vector.broadcast %c60_i32 : i32 to vector<56x16xi32>
    %19 = arith.cmpi slt, %17, %18 : vector<56x16xi32>
    %cst_7 = arith.constant 0.000000e+00 : f32
    %20 = vector.broadcast %cst_7 : f32 to vector<56x16xf32>
    %21 = arith.select %19, %13, %20 : vector<56x16xi1>, vector<56x16xf32>
    %22 = vector.shape_cast %21 : vector<56x16xf32> to vector<7x8x16xf32>
    %c0_8 = arith.constant 0 : index
    %c0_9 = arith.constant 0 : index
    %23 = vector.load %arg5[%c0_8, %c0_9] : memref<8x16xf32, #tpu.memory_space<vmem>>, vector<8x16xf32>
    %24 = math.absf %22 : vector<7x8x16xf32>
    %cst_10 = arith.constant dense<0.000000e+00> : vector<8x16xf32>
    %25 = vector.multi_reduction <add>, %24, %cst_10 [0] : vector<7x8x16xf32> to vector<8x16xf32>
    %26 = arith.addf %23, %25 : vector<8x16xf32>
    %c0_11 = arith.constant 0 : index
    %c0_12 = arith.constant 0 : index
    %27 = vector.load %arg5[%c0_11, %c0_12] : memref<8x16xf32, #tpu.memory_space<vmem>>, vector<8x16xf32>
    tpu.vector_store %arg5[%c0_11, %c0_12], %26 {strides = array<i32>} : memref<8x16xf32, #tpu.memory_space<vmem>>, vector<8x16xf32>,
    %c0_13 = arith.constant 0 : index
    %c0_14 = arith.constant 0 : index
    %28 = vector.load %arg6[%c0_13, %c0_14] : memref<8x16xf32, #tpu.memory_space<vmem>>, vector<8x16xf32>
    %29 = arith.mulf %22, %22 : vector<7x8x16xf32>
    %cst_15 = arith.constant dense<0.000000e+00> : vector<8x16xf32>
    %30 = vector.multi_reduction <add>, %29, %cst_15 [0] : vector<7x8x16xf32> to vector<8x16xf32>
    %31 = arith.addf %28, %30 : vector<8x16xf32>
    %c0_16 = arith.constant 0 : index
    %c0_17 = arith.constant 0 : index
    %32 = vector.load %arg6[%c0_16, %c0_17] : memref<8x16xf32, #tpu.memory_space<vmem>>, vector<8x16xf32>
    tpu.vector_store %arg6[%c0_16, %c0_17], %31 {strides = array<i32>} : memref<8x16xf32, #tpu.memory_space<vmem>>, vector<8x16xf32>,
    %c1_i32 = arith.constant 1 : i32
    %33 = arith.cmpi eq, %arg0, %c1_i32 : i32
    %34 = arith.extui %33 : i1 to i32
    %c0_i32_18 = arith.constant 0 : i32
    %35 = arith.cmpi ne, %34, %c0_i32_18 : i32
    scf.if %35 {
      %c0_19 = arith.constant 0 : index
      %c0_20 = arith.constant 0 : index
      %36 = vector.load %arg5[%c0_19, %c0_20] : memref<8x16xf32, #tpu.memory_space<vmem>>, vector<8x16xf32>
      %37 = vector.shape_cast %36 : vector<8x16xf32> to vector<1x8x16xf32>
      %cst_21 = arith.constant dense<0.000000e+00> : vector<1xf32>
      %38 = vector.multi_reduction <add>, %37, %cst_21 [1, 2] : vector<1x8x16xf32> to vector<1xf32>
      %39 = vector.shape_cast %38 : vector<1xf32> to vector<1x1x1xf32>
      %40 = vector.extract %39[0, 0, 0] : f32 from vector<1x1x1xf32>
      %41 = vector.broadcast %40 : f32 to vector<1x1xf32>
      %c0_22 = arith.constant 0 : index
      %c0_23 = arith.constant 0 : index
      %42 = vector.load %arg3[%c0_22, %c0_23] : memref<1x1xf32, #tpu.memory_space<vmem>>, vector<1x1xf32>
      tpu.vector_store %arg3[%c0_22, %c0_23], %41 {strides = array<i32>} : memref<1x1xf32, #tpu.memory_space<vmem>>, vector<1x1xf32>,
      %c0_24 = arith.constant 0 : index
      %c0_25 = arith.constant 0 : index
      %43 = vector.load %arg6[%c0_24, %c0_25] : memref<8x16xf32, #tpu.memory_space<vmem>>, vector<8x16xf32>
      %44 = vector.shape_cast %43 : vector<8x16xf32> to vector<1x8x16xf32>
      %cst_26 = arith.constant dense<0.000000e+00> : vector<1xf32>
      %45 = vector.multi_reduction <add>, %44, %cst_26 [1, 2] : vector<1x8x16xf32> to vector<1xf32>
      %46 = vector.shape_cast %45 : vector<1xf32> to vector<1x1x1xf32>
      %47 = vector.extract %46[0, 0, 0] : f32 from vector<1x1x1xf32>
      %48 = vector.broadcast %47 : f32 to vector<1x1xf32>
      %c0_27 = arith.constant 0 : index
      %c0_28 = arith.constant 0 : index
      %49 = vector.load %arg4[%c0_27, %c0_28] : memref<1x1xf32, #tpu.memory_space<vmem>>, vector<1x1xf32>
      tpu.vector_store %arg4[%c0_27, %c0_28], %48 {strides = array<i32>} : memref<1x1xf32, #tpu.memory_space<vmem>>, vector<1x1xf32>,
    } else {
    }
    return
  }
  func.func @transform_0(%arg0: i32) -> (i32, i32) {
    %c0_i32 = arith.constant 0 : i32
    %c0_i32_0 = arith.constant 0 : i32
    return %arg0, %c0_i32 : i32, i32
  }
  func.func @transform_1(%arg0: i32) -> (i32, i32) {
    %c0_i32 = arith.constant 0 : i32
    %c0_i32_0 = arith.constant 0 : i32
    return %arg0, %c0_i32 : i32, i32
  }
  func.func @transform_2(%arg0: i32) -> (i32, i32) {
    %c0_i32 = arith.constant 0 : i32
    %c0_i32_0 = arith.constant 0 : i32
    %c0_i32_1 = arith.constant 0 : i32
    return %c0_i32, %c0_i32_0 : i32, i32
  }
  func.func @transform_3(%arg0: i32) -> (i32, i32) {
    %c0_i32 = arith.constant 0 : i32
    %c0_i32_0 = arith.constant 0 : i32
    %c0_i32_1 = arith.constant 0 : i32
    return %c0_i32, %c0_i32_0 : i32, i32
  }
}

</mosaic_0001>

<llo_original>
// kernel: tpu_custom_call.1
$region0: #{tpu_custom_call.1}
  #allocation0 [shape = 'u32[]', space=smem, size = 0x4, offset = 0x4, fixed_abs, tag = 'smem constant byte address 0x4 - core index']
  #allocation1 [shape = 'u32[144,128]{1,0:T(1,128)}', space=vmem, size = 0x12000, scoped, tag = 'internal scratch']
  #allocation2 [shape = 'f32[8,16]{1,0:T(8,128)}', space=vmem, size = 0x1000, scoped, tag = 'scratch operand']
  #allocation3 [shape = 'f32[8,16]{1,0:T(8,128)}', space=vmem, size = 0x1000, scoped, tag = 'scratch operand']
  %s0 = inlined_call_operand.vmem [shape: f32[60,16], index: 0, kind: input, shape index: {}]
  %s1 = inlined_call_operand.vmem [shape: f32[60,16], index: 1, kind: input, shape index: {}]
  %s2 = inlined_call_operand.hbm [shape: f32[1,1], index: 2, kind: output, shape index: {0}]
  %s3 = inlined_call_operand.hbm [shape: f32[1,1], index: 3, kind: output, shape index: {1}]
  %4 = xla_tuple %s2, %s3
  %s5 = sld [smem:[#allocation0]]
  $region57: #{tpu_custom_call.1} parent=0
    _
  %s7 = ssub.s32 1, %s5
  %s8 = scalar_select 0, %s7, %s5
  $region1: #{tpu_custom_call.1} parent=0
    #allocation4 [shape = 'u8[512]{0}', space=vmem, size = 0x400, scoped, tag = 'output window, operand 0, single buffered']
    #allocation5 [shape = 's32[2]{0}', space=sflag, size = 0x8, scoped, tag = 'scoped memory for tpu_custom_call.1']
    #allocation6 [shape = 'u8[512]{0}', space=vmem, size = 0x400, scoped, tag = 'output window, operand 1, single buffered']
    #allocation7 [shape = 's32[1]{0}', space=sflag, size = 0x4, scoped, tag = 'scoped memory for tpu_custom_call.1']
    %9 = vsyncpa [#allocation5], 0
    %10 = vsyncpa [#allocation7], 0
    loop: start=0, step=1, limit=4
    $region2: #{tpu_custom_call.1} parent=1 // loop_pre_header
      _
    $region3: #{tpu_custom_call.1} parent=1 // loop_header
      %s12 = sphi 0, %s16
      %p13 = scmp.ge.s32.totalorder %s12, 4
      %s22 = sphi 0, %s24
      %s25 = sphi 0, %s22
      %s26 = sphi 0, %s25
      %s42 = sphi 0, %s26
      %s48 = sphi 0, %s50
      %s51 = sphi 0, %s48
      %s52 = sphi 0, %s51
      %s68 = sphi 0, %s52
      %s72 = sphi 0, %s72
      %s74 = sphi 0, %s72
      %s75 = sphi 0, %s74
      %s89 = sphi 0, %s75
      %s93 = sphi 0, %s93
      %s95 = sphi 0, %s93
      %s96 = sphi 0, %s95
      %s110 = sphi 0, %s96
    $region4: #{tpu_custom_call.1} parent=1 // loop_header_branch
      %15 = sbr.rel (%p13) target = $region8
    $region5: #{tpu_custom_call.1} parent=1 // loop_body
      %s17 = ssub.s32 %s12, 1
      %s18 = ssub.s32 %s12, 2
      %s19 = sadd.s32 %s12, 1
      %s20 = ssub.s32 %s12, %s19
      %p21 = scmp.eq.s32.totalorder %s20, 0
      %s23 = sadd.s32 %s22, 1
      %s24 = scalar_select %p21, %s22, %s23
      %p27 = pneg %p21
      %p28 = scmp.eq.s32.totalorder %s12, 1
      %p29 = por %p27, %p28
      %p30 = scmp.ne.s32.totalorder %s22, %s25
      %p31 = scmp.eq.s32.totalorder %s12, 0
      %p32 = por %p30, %p31
      %p33 = scmp.ne.s32.totalorder %s22, %s25
      %p34 = scmp.eq.s32.totalorder %s17, 1
      %p35 = por %p33, %p34
      %p36 = scmp.ne.s32.totalorder %s25, %s26
      %p37 = scmp.eq.s32.totalorder %s17, 0
      %p38 = por %p36, %p37
      %p39 = scmp.ne.s32.totalorder %s25, %s26
      %p40 = scmp.eq.s32.totalorder %s18, 1
      %p41 = por %p39, %p40
      %p43 = scmp.ne.s32.totalorder %s26, %s42
      %p44 = scmp.eq.s32.totalorder %s18, 0
      %p45 = por %p43, %p44
      %s46 = ssub.s32 %s12, %s19
      %p47 = scmp.eq.s32.totalorder %s46, 0
      %s49 = sadd.s32 %s48, 1
      %s50 = scalar_select %p47, %s48, %s49
      %p53 = pneg %p47
      %p54 = scmp.eq.s32.totalorder %s12, 1
      %p55 = por %p53, %p54
      %p56 = scmp.ne.s32.totalorder %s48, %s51
      %p57 = scmp.eq.s32.totalorder %s12, 0
      %p58 = por %p56, %p57
      %p59 = scmp.ne.s32.totalorder %s48, %s51
      %p60 = scmp.eq.s32.totalorder %s17, 1
      %p61 = por %p59, %p60
      %p62 = scmp.ne.s32.totalorder %s51, %s52
      %p63 = scmp.eq.s32.totalorder %s17, 0
      %p64 = por %p62, %p63
      %p65 = scmp.ne.s32.totalorder %s51, %s52
      %p66 = scmp.eq.s32.totalorder %s18, 1
      %p67 = por %p65, %p66
      %p69 = scmp.ne.s32.totalorder %s52, %s68
      %p70 = scmp.eq.s32.totalorder %s18, 0
      %p71 = por %p69, %p70
      %s73 = sadd.s32 %s72, 1
      %p76 = scmp.eq.s32.totalorder %s12, 1
      %p77 = scmp.ne.s32.totalorder %s72, %s74
      %p78 = scmp.eq.s32.totalorder %s12, 0
      %p79 = por %p77, %p78
      %p80 = scmp.ne.s32.totalorder %s72, %s74
      %p81 = scmp.eq.s32.totalorder %s17, 1
      %p82 = por %p80, %p81
      %p83 = scmp.ne.s32.totalorder %s74, %s75
      %p84 = scmp.eq.s32.totalorder %s17, 0
      %p85 = por %p83, %p84
      %p86 = scmp.ne.s32.totalorder %s74, %s75
      %p87 = scmp.eq.s32.totalorder %s18, 1
      %p88 = por %p86, %p87
      %p90 = scmp.ne.s32.totalorder %s75, %s89
      %p91 = scmp.eq.s32.totalorder %s18, 0
      %p92 = por %p90, %p91
      %s94 = sadd.s32 %s93, 1
      %p97 = scmp.eq.s32.totalorder %s12, 1
      %p98 = scmp.ne.s32.totalorder %s93, %s95
      %p99 = scmp.eq.s32.totalorder %s12, 0
      %p100 = por %p98, %p99
      %p101 = scmp.ne.s32.totalorder %s93, %s95
      %p102 = scmp.eq.s32.totalorder %s17, 1
      %p103 = por %p101, %p102
      %p104 = scmp.ne.s32.totalorder %s95, %s96
      %p105 = scmp.eq.s32.totalorder %s17, 0
      %p106 = por %p104, %p105
      %p107 = scmp.ne.s32.totalorder %s95, %s96
      %p108 = scmp.eq.s32.totalorder %s18, 1
      %p109 = por %p107, %p108
      %p111 = scmp.ne.s32.totalorder %s96, %s110
      %p112 = scmp.eq.s32.totalorder %s18, 0
      %p113 = por %p111, %p112
      %p114 = scmp.le.s32.totalorder 1, %s12
      %p115 = scmp.lt.s32.totalorder %s12, 3
      %p116 = pnand %p114, %p115
      %p117 = pneg %p116
      // Predicated region
      $region9: #{tpu_custom_call.1} parent=5 // pred_check
        _
      $region10: #{tpu_custom_call.1} parent=5 // pred_check_branch
        %119 = sbr.rel (%p116) target = $region12
      $region11: #{tpu_custom_call.1} parent=5 // pred_region
        %s120 = ssub.s32 %s12, 1
      $region12: #{tpu_custom_call.1} parent=5 // pred_fallthru
        _
      %p121 = scmp.lt.s32.totalorder %s12, 2
      // Predicated region
      $region13: #{tpu_custom_call.1} parent=5 // pred_check
        %p122 = pneg %p121
      $region14: #{tpu_custom_call.1} parent=5 // pred_check_branch
        %124 = sbr.rel (%p122) target = $region16
      $region15: #{tpu_custom_call.1} parent=5 // pred_region
        // Predicated region
        $region17: #{tpu_custom_call.1} parent=15 // pred_check
          %p125 = pneg %p32
        $region18: #{tpu_custom_call.1} parent=15 // pred_check_branch
          %127 = sbr.rel (%p125) target = $region20
        $region19: #{tpu_custom_call.1} parent=15 // pred_region
          %s128 = smul.u32 7, %s12
          %s129 = ssub.s32 8, %s128
          %p130 = scmp.lt.s32.totalorder %s129, 7
          %s131 = scalar_select %p130, %s129, 7
          %s132 = smul.u32 128, %s131
          %p133 = scmp.lt.s32.totalorder %s128, 7
          %s134 = scalar_select %p133, %s128, 7
          %s135 = smul.addr %s134, 8
          %s136 = scalar_lea.vmem %s0, %s135
          %s137 = smul.u32 7, %s12
          %s138 = ssub.s32 8, %s137
          %p139 = scmp.lt.s32.totalorder %s138, 7
          %s140 = scalar_select %p139, %s138, 7
          %s141 = smul.u32 128, %s140
        $region20: #{tpu_custom_call.1} parent=15 // pred_fallthru
          _
        // Predicated region
        $region21: #{tpu_custom_call.1} parent=15 // pred_check
          %p142 = pneg %p58
        $region22: #{tpu_custom_call.1} parent=15 // pred_check_branch
          %144 = sbr.rel (%p142) target = $region24
        $region23: #{tpu_custom_call.1} parent=15 // pred_region
          %s145 = smul.u32 7, %s12
          %s146 = ssub.s32 8, %s145
          %p147 = scmp.lt.s32.totalorder %s146, 7
          %s148 = scalar_select %p147, %s146, 7
          %s149 = smul.u32 128, %s148
          %p150 = scmp.lt.s32.totalorder %s145, 7
          %s151 = scalar_select %p150, %s145, 7
          %s152 = smul.addr %s151, 8
          %s153 = scalar_lea.vmem %s1, %s152
          %s154 = smul.u32 7, %s12
          %s155 = ssub.s32 8, %s154
          %p156 = scmp.lt.s32.totalorder %s155, 7
          %s157 = scalar_select %p156, %s155, 7
          %s158 = smul.u32 128, %s157
        $region24: #{tpu_custom_call.1} parent=15 // pred_fallthru
          _
      $region16: #{tpu_custom_call.1} parent=5 // pred_fallthru
        _
      %p159 = scmp.le.s32.totalorder 1, %s12
      %p160 = scmp.lt.s32.totalorder %s12, 3
      %p161 = pnand %p159, %p160
      %p162 = pneg %p161
      // Predicated region
      $region25: #{tpu_custom_call.1} parent=5 // pred_check
        _
      $region26: #{tpu_custom_call.1} parent=5 // pred_check_branch
        %164 = sbr.rel (%p161) target = $region28
      $region27: #{tpu_custom_call.1} parent=5 // pred_region
        %s165 = ssub.s32 %s12, 1
        %s166 = smul.u32 7, %s17
        %s167 = ssub.s32 8, %s166
        %p168 = scmp.lt.s32.totalorder %s167, 7
        %s169 = scalar_select %p168, %s167, 7
        %s170 = smul.u32 128, %s169
        %p171 = scmp.lt.s32.totalorder %s166, 7
        %s172 = scalar_select %p171, %s166, 7
        %s173 = smul.addr %s172, 8
        %s174 = scalar_lea.vmem %s0, %s173
        %p175 = pneg %p38
        %p176 = pneg %p35
        %s177 = smul.u32 7, %s17
        %s178 = ssub.s32 8, %s177
        %p179 = scmp.lt.s32.totalorder %s178, 7
        %s180 = scalar_select %p179, %s178, 7
        %s181 = smul.u32 128, %s180
        %p182 = scmp.lt.s32.totalorder %s177, 7
        %s183 = scalar_select %p182, %s177, 7
        %s184 = smul.addr %s183, 8
        %s185 = scalar_lea.vmem %s1, %s184
        %p186 = pneg %p64
        %p187 = pneg %p61
        %p188 = pneg %p85
        %p189 = pneg %p82
        %p190 = pneg %p106
        %p191 = pneg %p103
        %s192 = smul.u32 7, %s17
        %s193 = ssub.s32 8, %s192
        %p194 = scmp.lt.s32.totalorder %s193, 7
        %s195 = scalar_select %p194, %s193, 7
        %s196 = smul.u32 128, %s195
        %p197 = scmp.lt.s32.totalorder %s192, 7
        %s198 = scalar_select %p197, %s192, 7
        %s199 = smul.addr %s198, 8
        %s200 = scalar_lea.vmem %s0, %s199
        %s201 = smul.u32 7, %s17
        %s202 = ssub.s32 8, %s201
        %p203 = scmp.lt.s32.totalorder %s202, 7
        %s204 = scalar_select %p203, %s202, 7
        %s205 = smul.u32 128, %s204
        %s206 = smul.u32 7, %s17
        %s207 = ssub.s32 8, %s206
        %p208 = scmp.lt.s32.totalorder %s207, 7
        %s209 = scalar_select %p208, %s207, 7
        %s210 = smul.u32 128, %s209
        %p211 = scmp.lt.s32.totalorder %s206, 7
        %s212 = scalar_select %p211, %s206, 7
        %s213 = smul.addr %s212, 8
        %s214 = scalar_lea.vmem %s1, %s213
        %s215 = smul.u32 7, %s17
        %s216 = ssub.s32 8, %s215
        %p217 = scmp.lt.s32.totalorder %s216, 7
        %s218 = scalar_select %p217, %s216, 7
        %s219 = smul.u32 128, %s218
        %p220 = scmp.eq.s32.totalorder %s17, 0
        // Predicated region
        $region29: #{tpu_custom_call.1} parent=27 // pred_check
          %p221 = pneg %p220
        $region30: #{tpu_custom_call.1} parent=27 // pred_check_branch
          %223 = sbr.rel (%p221) target = $region32
        $region31: #{tpu_custom_call.1} parent=27 // pred_region
          %vm224 = vcmask 130048
          %225 = vst.msk [vmem:[#allocation2] sm:$0xff] %vm224, 0.0
          %226 = vst.msk [vmem:[#allocation3] sm:$0xff] %vm224, 0.0
        $region32: #{tpu_custom_call.1} parent=27 // pred_fallthru
          _
        %v227 = vld [vmem:[%s200] sm:$0xff]
        %v228 = vld [vmem:[%s200 + $0x8] sm:$0xff]
        %v229 = vld [vmem:[%s200 + $0x10] sm:$0xff]
        %v230 = vld [vmem:[%s200 + $0x18] sm:$0xff]
        %v231 = vld [vmem:[%s200 + $0x20] sm:$0xff]
        %v232 = vld [vmem:[%s200 + $0x28] sm:$0xff]
        %v233 = vld [vmem:[%s200 + $0x30] sm:$0xff]
        %v234 = vld [vmem:[%s214] sm:$0xff]
        %v235 = vld [vmem:[%s214 + $0x8] sm:$0xff]
        %v236 = vld [vmem:[%s214 + $0x10] sm:$0xff]
        %v237 = vld [vmem:[%s214 + $0x18] sm:$0xff]
        %v238 = vld [vmem:[%s214 + $0x20] sm:$0xff]
        %v239 = vld [vmem:[%s214 + $0x28] sm:$0xff]
        %v240 = vld [vmem:[%s214 + $0x30] sm:$0xff]
        %v241 = vmul.f32 %v227, 255.0
        %v242 = vmul.f32 %v228, 255.0
        %v243 = vmul.f32 %v229, 255.0
        %v244 = vmul.f32 %v230, 255.0
        %v245 = vmul.f32 %v231, 255.0
        %v246 = vmul.f32 %v232, 255.0
        %v247 = vmul.f32 %v233, 255.0
        %v248 = vmax.f32 %v241, 0.0
        %v249 = vmax.f32 %v242, 0.0
        %v250 = vmax.f32 %v243, 0.0
        %v251 = vmax.f32 %v244, 0.0
        %v252 = vmax.f32 %v245, 0.0
        %v253 = vmax.f32 %v246, 0.0
        %v254 = vmax.f32 %v247, 0.0
        %v255 = vmin.f32 %v248, 255.0
        %v256 = vmin.f32 %v249, 255.0
        %v257 = vmin.f32 %v250, 255.0
        %v258 = vmin.f32 %v251, 255.0
        %v259 = vmin.f32 %v252, 255.0
        %v260 = vmin.f32 %v253, 255.0
        %v261 = vmin.f32 %v254, 255.0
        %v262 = vmul.f32 %v234, 255.0
        %v263 = vmul.f32 %v235, 255.0
        %v264 = vmul.f32 %v236, 255.0
        %v265 = vmul.f32 %v237, 255.0
        %v266 = vmul.f32 %v238, 255.0
        %v267 = vmul.f32 %v239, 255.0
        %v268 = vmul.f32 %v240, 255.0
        %v269 = vsub.f32 %v255, %v262
        %v270 = vsub.f32 %v256, %v263
        %v271 = vsub.f32 %v257, %v264
        %v272 = vsub.f32 %v258, %v265
        %v273 = vsub.f32 %v259, %v266
        %v274 = vsub.f32 %v260, %v267
        %v275 = vsub.f32 %v261, %v268
        %s276 = smul.u32 %s17, 56
        %v277 = vlaneseq
        %v278 = vshrl.u32 %v277, 7
        %v279 = vadd.s32 %v278, 8
        %v280 = vadd.s32 %v278, 16
        %v281 = vadd.s32 %v278, 24
        %v282 = vadd.s32 %v278, 32
        %v283 = vadd.s32 %v278, 40
        %v284 = vadd.s32 %v278, 48
        %v285 = vstv %s276
        %v286 = vadd.s32 %v285, %v278
        %v287 = vadd.s32 %v285, %v279
        %v288 = vadd.s32 %v285, %v280
        %v289 = vadd.s32 %v285, %v281
        %v290 = vadd.s32 %v285, %v282
        %v291 = vadd.s32 %v285, %v283
        %v292 = vadd.s32 %v285, %v284
        %vm293 = vcmp.lt.s32.totalorder %v286, 60
        %vm294 = vcmp.lt.s32.totalorder %v287, 60
        %vm295 = vcmp.lt.s32.totalorder %v288, 60
        %vm296 = vcmp.lt.s32.totalorder %v289, 60
        %vm297 = vcmp.lt.s32.totalorder %v290, 60
        %vm298 = vcmp.lt.s32.totalorder %v291, 60
        %vm299 = vcmp.lt.s32.totalorder %v292, 60
        %v300 = vsel %vm293, %v269, 0.0
        %v301 = vsel %vm294, %v270, 0.0
        %v302 = vsel %vm295, %v271, 0.0
        %v303 = vsel %vm296, %v272, 0.0
        %v304 = vsel %vm297, %v273, 0.0
        %v305 = vsel %vm298, %v274, 0.0
        %v306 = vsel %vm299, %v275, 0.0
        %v307 = vld [vmem:[#allocation2] sm:$0xff]
        %v308 = vand.u32 2147483647, %v300
        %v309 = vand.u32 2147483647, %v301
        %v310 = vand.u32 2147483647, %v302
        %v311 = vand.u32 2147483647, %v303
        %v312 = vand.u32 2147483647, %v304
        %v313 = vand.u32 2147483647, %v305
        %v314 = vand.u32 2147483647, %v306
        %vm315 = vcmask 130048
        %v316 = vsel %vm315, %v308, 0.0
        %v317 = vsel %vm315, %v309, 0.0
        %v318 = vadd.f32 %v316, %v317
        %v319 = vsel %vm315, %v310, 0.0
        %v320 = vadd.f32 %v318, %v319
        %v321 = vsel %vm315, %v311, 0.0
        %v322 = vadd.f32 %v320, %v321
        %v323 = vsel %vm315, %v312, 0.0
        %v324 = vadd.f32 %v322, %v323
        %v325 = vsel %vm315, %v313, 0.0
        %v326 = vadd.f32 %v324, %v325
        %v327 = vsel %vm315, %v314, 0.0
        %v328 = vadd.f32 %v326, %v327
        %v329 = vadd.f32 %v307, %v328
        %330 = vst.msk [vmem:[#allocation2] sm:$0xff] %vm315, %v329
        %v331 = vld [vmem:[#allocation3] sm:$0xff]
        %v332 = vmul.f32 %v300, %v300
        %v333 = vmul.f32 %v301, %v301
        %v334 = vmul.f32 %v302, %v302
        %v335 = vmul.f32 %v303, %v303
        %v336 = vmul.f32 %v304, %v304
        %v337 = vmul.f32 %v305, %v305
        %v338 = vmul.f32 %v306, %v306
        %v339 = vsel %vm315, %v332, 0.0
        %v340 = vsel %vm315, %v333, 0.0
        %v341 = vadd.f32 %v339, %v340
        %v342 = vsel %vm315, %v334, 0.0
        %v343 = vadd.f32 %v341, %v342
        %v344 = vsel %vm315, %v335, 0.0
        %v345 = vadd.f32 %v343, %v344
        %v346 = vsel %vm315, %v336, 0.0
        %v347 = vadd.f32 %v345, %v346
        %v348 = vsel %vm315, %v337, 0.0
        %v349 = vadd.f32 %v347, %v348
        %v350 = vsel %vm315, %v338, 0.0
        %v351 = vadd.f32 %v349, %v350
        %v352 = vadd.f32 %v331, %v351
        %353 = vst.msk [vmem:[#allocation3] sm:$0xff] %vm315, %v352
        %p354 = scmp.eq.s32.totalorder %s17, 1
        // Predicated region
        $region33: #{tpu_custom_call.1} parent=27 // pred_check
          %p355 = pneg %p354
        $region34: #{tpu_custom_call.1} parent=27 // pred_check_branch
          %357 = sbr.rel (%p355) target = $region36
        $region35: #{tpu_custom_call.1} parent=27 // pred_region
          %v358 = vld [vmem:[#allocation2] sm:$0xff]
          %v359 = vsel %vm315, %v358, 0.0
          %360 = vadd.xlane.f32.xlu0 %v359
          %v361 = vpop.xlane.xlu0 %360
          %v362 = vrot.slane %v361, 4
          %v363 = vadd.f32 %v361, %v362
          %v364 = vrot.slane %v363, 2
          %v365 = vadd.f32 %v363, %v364
          %v366 = vrot.slane %v365, 1
          %v367 = vadd.f32 %v365, %v366
          %s368 = vtos %v367
          %v369 = vstv %s368
          %vm370 = vcmask 0
          %371 = vst.msk [vmem:[#allocation4] sm:$0x1] %vm370, %v369
          %v372 = vld [vmem:[#allocation3] sm:$0xff]
          %v373 = vsel %vm315, %v372, 0.0
          %374 = vadd.xlane.f32.xlu0 %v373
          %v375 = vpop.xlane.xlu0 %374
          %v376 = vrot.slane %v375, 4
          %v377 = vadd.f32 %v375, %v376
          %v378 = vrot.slane %v377, 2
          %v379 = vadd.f32 %v377, %v378
          %v380 = vrot.slane %v379, 1
          %v381 = vadd.f32 %v379, %v380
          %s382 = vtos %v381
          %v383 = vstv %s382
          %384 = vst.msk [vmem:[#allocation6] sm:$0x1] %vm370, %v383
        $region36: #{tpu_custom_call.1} parent=27 // pred_fallthru
          _
        // Predicated region
        $region37: #{tpu_custom_call.1} parent=27 // pred_check
          %p385 = pneg %p82
        $region38: #{tpu_custom_call.1} parent=27 // pred_check_branch
          %387 = sbr.rel (%p385) target = $region40
        $region39: #{tpu_custom_call.1} parent=27 // pred_region
          %s389 = ssub.s32 16, 16
          %390 = vsyncadd [#allocation5], %s389
          %s392 = sshll.u32 [#allocation4], 4
          %s393 = int_to_ptr.vmem [resolvable:$true] %s392
          %395 = dma.vmem_to_hbm [thread:$0]  %s393, 16, %s2, [#allocation5]
        $region40: #{tpu_custom_call.1} parent=27 // pred_fallthru
          _
        // Predicated region
        $region41: #{tpu_custom_call.1} parent=27 // pred_check
          %p396 = pneg %p103
        $region42: #{tpu_custom_call.1} parent=27 // pred_check_branch
          %398 = sbr.rel (%p396) target = $region44
        $region43: #{tpu_custom_call.1} parent=27 // pred_region
          %s400 = ssub.s32 16, 16
          %401 = vsyncadd [#allocation7], %s400
          %s403 = sshll.u32 [#allocation6], 4
          %s404 = int_to_ptr.vmem [resolvable:$true] %s403
          %406 = dma.vmem_to_hbm [thread:$0]  %s404, 16, %s3, [#allocation7]
        $region44: #{tpu_custom_call.1} parent=27 // pred_fallthru
          _
        // Predicated region
        $region45: #{tpu_custom_call.1} parent=27 // pred_check
          %p407 = pneg %p82
        $region46: #{tpu_custom_call.1} parent=27 // pred_check_branch
          %409 = sbr.rel (%p407) target = $region48
        $region47: #{tpu_custom_call.1} parent=27 // pred_region
          %410 = dma.done [#allocation5], 16
        $region48: #{tpu_custom_call.1} parent=27 // pred_fallthru
          _
        // Predicated region
        $region49: #{tpu_custom_call.1} parent=27 // pred_check
          %p411 = pneg %p103
        $region50: #{tpu_custom_call.1} parent=27 // pred_check_branch
          %413 = sbr.rel (%p411) target = $region52
        $region51: #{tpu_custom_call.1} parent=27 // pred_region
          %414 = dma.done [#allocation7], 16
        $region52: #{tpu_custom_call.1} parent=27 // pred_fallthru
          _
      $region28: #{tpu_custom_call.1} parent=5 // pred_fallthru
        _
      %p415 = scmp.le.s32.totalorder 2, %s12
      // Predicated region
      $region53: #{tpu_custom_call.1} parent=5 // pred_check
        %p416 = pneg %p415
      $region54: #{tpu_custom_call.1} parent=5 // pred_check_branch
        %418 = sbr.rel (%p416) target = $region56
      $region55: #{tpu_custom_call.1} parent=5 // pred_region
        %s419 = ssub.s32 %s12, 2
      $region56: #{tpu_custom_call.1} parent=5 // pred_fallthru
        _
    $region6: #{tpu_custom_call.1} parent=1 // loop_footer
      %s16 = sadd.s32 1, %s12
    $region7: #{tpu_custom_call.1} parent=1 // loop_footer_branch
      %11 = sbr.rel target = $region3
    $region8: #{tpu_custom_call.1} parent=1 // loop_exit
      _
    %420 = vsyncpa [#allocation5], 1
    %s421 = scalar_lea.sflag [#allocation5], 1
    %422 = vsyncpa %s421, 1
    %423 = vsyncpa [#allocation7], 1

</llo_original>
